<compile_context>
chip_gen: v5e
topology: v5e:2x2
jax: 0.10.0
libtpu: 0.0.40
codegen_flags: <defaults>
</compile_context>

<pallas_src>
import functools

import jax
import jax.numpy as jnp
from jax.experimental import pallas as pl
from jax.experimental.pallas import tpu as pltpu


def _sine_kernel(x_ref, o_ref, *, w0):
    # Elementwise: y = sin(w0 * x). Compute in f32 (input/output HBM traffic
    # stays in the original dtype), then cast back on the store.
    x = x_ref[...].astype(jnp.float32)
    o_ref[...] = jnp.sin(x * jnp.float32(w0)).astype(o_ref.dtype)


def sine(x, w0=1.0, *, block_bytes=4 << 20):
    """Applies y = sin(w0 * x) elementwise (matches torch.sin(self.w0 * x))."""
    w0 = float(w0)
    orig_shape = x.shape
    dtype = x.dtype

    n = x.size
    if n == 0:
        return x

    flat = x.reshape(-1)

    # ---- Lane-dense column width; avoid any pad whenever n % 128 == 0. ----
    cols = None
    for c in (1024, 512, 256, 128):
        if n % c == 0:
            cols = c
            break
    if cols is None:
        # Ragged (n not a multiple of 128): pad the tail once (rare path).
        cols = 1024 if n >= 1024 else 128

    rows = pl.cdiv(n, cols)
    padded = rows * cols
    if padded != n:
        flat = jnp.pad(flat, (0, padded - n))
    x2 = flat.reshape(rows, cols)

    # ---- Row tile: ~block_bytes per block, constant across dtypes. ----
    itemsize = jnp.dtype(dtype).itemsize
    tr_cap = max(8, block_bytes // (cols * itemsize))  # multiple of 8 by construction
    if rows > tr_cap:
        tr = tr_cap
    elif rows >= 16:
        # Whole array fits in one block: split the row axis so the grid has
        # >=2 blocks and both TensorCores (v7x megacore) get work.
        tr = max(8, (rows // 2) // 8 * 8)
    else:
        tr = rows  # single block; equals the full array dim (allowed)

    grid = (pl.cdiv(rows, tr),)
    kernel = functools.partial(_sine_kernel, w0=w0)

    out = pl.pallas_call(
        kernel,
        out_shape=jax.ShapeDtypeStruct((rows, cols), dtype),
        grid_spec=pltpu.PrefetchScalarGridSpec(
            num_scalar_prefetch=0,
            grid=grid,
            in_specs=[pl.BlockSpec((tr, cols), lambda i: (i, 0))],
            out_specs=pl.BlockSpec((tr, cols), lambda i: (i, 0)),
        ),
        compiler_params=pltpu.CompilerParams(
            dimension_semantics=("parallel",),   # shards row blocks across TCs on v7x
            vmem_limit_bytes=40 << 20,           # > v5e scoped default, < v7x physical
        ),
    )(x2)

    out = out.reshape(-1)
    if padded != n:
        out = out[:n]
    return out.reshape(orig_shape)


if __name__ == "__main__":
    key = jax.random.PRNGKey(0)
    w0 = 30.0  # typical SIREN first-layer w0; module default is 1.0

    # Main case: (batch, channels, spatial, spatial), f32, n % 1024 == 0 (no pad).
    x = jax.random.normal(key, (2, 4, 16, 16), dtype=jnp.float32)
    y = jax.block_until_ready(sine(x, w0=w0))
    y_ref = jnp.sin(w0 * x)
    assert y.shape == x.shape and y.dtype == x.dtype
    assert jnp.max(jnp.abs(y - y_ref)) < 1e-4

    k1, k2, k3 = jax.random.split(key, 3)

    # Ragged case (n not a multiple of 128) — exercises the pad/slice path.
    xr = jax.random.normal(k1, (3, 5, 7, 11), dtype=jnp.float32)
    yr = jax.block_until_ready(sine(xr, w0=w0))
    assert yr.shape == xr.shape
    assert jnp.max(jnp.abs(yr - jnp.sin(w0 * xr))) < 1e-4

    # Multi-block case — exercises the row-split (megacore) path.
    xl = jax.random.normal(k2, (64, 1024), dtype=jnp.float32)
    yl = jax.block_until_ready(sine(xl, w0=w0))
    assert jnp.max(jnp.abs(yl - jnp.sin(w0 * xl))) < 1e-4

    # bf16 case — HBM stays bf16, compute runs in f32 inside the kernel.
    xb = jax.random.normal(k3, (2, 4, 16, 16), dtype=jnp.bfloat16)
    yb = jax.block_until_ready(sine(xb, w0=w0))
    yb_ref = jnp.sin(w0 * xb.astype(jnp.float32)).astype(jnp.bfloat16)
    assert yb.dtype == jnp.bfloat16
    assert jnp.max(jnp.abs(yb.astype(jnp.float32) - yb_ref.astype(jnp.float32))) < 2e-2

    print("KERNEL_OK")
</pallas_src>

<mosaic_0001>
module attributes {stable_mosaic.version = 11 : i64} {
  func.func @_sine_kernel(%arg0: i32, %arg1: memref<2x1024xf32, #tpu.memory_space<vmem>>, %arg2: memref<2x1024xf32, #tpu.memory_space<vmem>>) attributes {dimension_semantics = [#tpu.dimension_semantics<parallel>], iteration_bounds = array<i64: 1>, scalar_prefetch = 0 : i64, scratch_operands = 0 : i64, tpu.core_type = #tpu.core_type<tc>, window_params = [{transform_indices = @transform_0, window_bounds = array<i64: 2, 1024>}, {transform_indices = @transform_1, window_bounds = array<i64: 2, 1024>}]} {
    %c0 = arith.constant 0 : index
    %c0_0 = arith.constant 0 : index
    %0 = vector.load %arg1[%c0, %c0_0] : memref<2x1024xf32, #tpu.memory_space<vmem>>, vector<2x1024xf32>
    %cst = arith.constant 3.000000e+01 : f32
    %1 = vector.broadcast %cst : f32 to vector<2x1024xf32>
    %2 = arith.mulf %0, %1 : vector<2x1024xf32>
    %3 = math.sin %2 : vector<2x1024xf32>
    %c0_1 = arith.constant 0 : index
    %c0_2 = arith.constant 0 : index
    %4 = vector.load %arg2[%c0_1, %c0_2] : memref<2x1024xf32, #tpu.memory_space<vmem>>, vector<2x1024xf32>
    tpu.vector_store %arg2[%c0_1, %c0_2], %3 {strides = array<i32>} : memref<2x1024xf32, #tpu.memory_space<vmem>>, vector<2x1024xf32>,
    return
  }
  func.func @transform_0(%arg0: i32) -> (i32, i32) {
    %c0_i32 = arith.constant 0 : i32
    %c0_i32_0 = arith.constant 0 : i32
    return %arg0, %c0_i32 : i32, i32
  }
  func.func @transform_1(%arg0: i32) -> (i32, i32) {
    %c0_i32 = arith.constant 0 : i32
    %c0_i32_0 = arith.constant 0 : i32
    return %arg0, %c0_i32 : i32, i32
  }
}

</mosaic_0001>

<llo_original>
// kernel: tpu_custom_call.1
$region0: #{tpu_custom_call.1}
  #allocation0 [shape = 'u32[]', space=smem, size = 0x4, offset = 0x4, fixed_abs, tag = 'smem constant byte address 0x4 - core index']
  #allocation1 [shape = 'u32[72,128]{1,0:T(1,128)}', space=vmem, size = 0x9000, scoped, tag = 'internal scratch']
  %s0 = inlined_call_operand.hbm [shape: f32[2,1024], index: 0, kind: input, shape index: {}]
  %s1 = inlined_call_operand.hbm [shape: f32[2,1024], index: 1, kind: output, shape index: {}]
  %s2 = sld [smem:[#allocation0]]
  $region18: #{tpu_custom_call.1} parent=0
    _
  %s4 = ssub.s32 1, %s2
  %s5 = scalar_select 0, %s4, %s2
  $region1: #{tpu_custom_call.1} parent=0
    #allocation2 [shape = 'u8[8192]{0}', space=vmem, size = 0x2000, scoped, tag = 'input window, operand 0, single buffered']
    #allocation3 [shape = 's32[1]{0}', space=sflag, size = 0x4, scoped, tag = 'scoped memory for tpu_custom_call.1']
    #allocation4 [shape = 's32[1]{0}', space=sflag, size = 0x4, scoped, tag = 'scoped memory for tpu_custom_call.1']
    #allocation5 [shape = 'u8[8192]{0}', space=vmem, size = 0x2000, scoped, tag = 'output window, operand 0, single buffered']
    %6 = vsyncpa [#allocation3], 0
    %7 = vsyncpa [#allocation4], 0
    // Predicated region
    $region2: #{tpu_custom_call.1} parent=1 // pred_check
      _
    $region3: #{tpu_custom_call.1} parent=1 // pred_check_branch
      %9 = sbr.rel (0) target = $region5
    $region4: #{tpu_custom_call.1} parent=1 // pred_region
      %11 = vsyncadd [#allocation3], 0
      %s13 = sshll.u32 %s0, 4
      %s14 = int_to_ptr.hbm [resolvable:$true] %s13
      %s15 = sshll.u32 [#allocation2], 4
      %s16 = int_to_ptr.vmem [resolvable:$true] %s15
      %18 = dma.hbm_to_vmem [thread:$0]  %s14, 256, %s16, [#allocation3]
    $region5: #{tpu_custom_call.1} parent=1 // pred_fallthru
      _
    // Predicated region
    $region6: #{tpu_custom_call.1} parent=1 // pred_check
      _
    $region7: #{tpu_custom_call.1} parent=1 // pred_check_branch
      %20 = sbr.rel (0) target = $region9
    $region8: #{tpu_custom_call.1} parent=1 // pred_region
      %22 = dma.done [#allocation3], 256
    $region9: #{tpu_custom_call.1} parent=1 // pred_fallthru
      _
    %v23 = vld [vmem:[#allocation2] sm:$0xff]
    %v24 = vld [vmem:[#allocation2 + $0x8] sm:$0xff]
    %v25 = vmul.f32 %v23, 30.0
    %v26 = vmul.f32 %v24, 30.0
    %v27 = vand.u32 2147483647, %v25
    %vm28 = vcmp.le.f32.partialorder %v27, 0.7853982
    %vm29 = vcmp.lt.s32.totalorder %v25, 0
    %v30 = vand.u32 %v25, 2139095040
    %v31 = vshrl.u32 %v30, 23
    %v32 = vsub.s32 %v31, 127
    %v33 = vand.u32 2147483647, %v25
    %v34 = vand.u32 %v33, 8388607
    %v35 = vor.u32 %v34, 8388608
    %v36 = vsub.s32 0, %v35
    %v37 = vadd.s32 %v32, 1
    %vm38 = vcmp.gt.s32.totalorder %v37, 0
    %v39 = vsel %vm38, %v37, 0
    %v40 = vshrl.u32 %v39, 5
    %v41 = vand.u32 %v39, 31
    %v42 = vsub.s32 32, %v41
    %v43 = vshrl.u32 683565275, %v42
    %v44 = vshll.u32 683565275, %v41
    %v45 = vshrl.u32 2475754826, %v42
    %v46 = vor.u32 %v44, %v45
    %v47 = vshll.u32 2475754826, %v41
    %v48 = vshrl.u32 2131351028, %v42
    %v49 = vor.u32 %v47, %v48
    %v50 = vshll.u32 2131351028, %v41
    %v51 = vshrl.u32 2102212464, %v42
    %v52 = vor.u32 %v50, %v51
    %v53 = vshll.u32 2102212464, %v41
    %v54 = vshrl.u32 920167782, %v42
    %v55 = vor.u32 %v53, %v54
    %v56 = vshll.u32 920167782, %v41
    %v57 = vshrl.u32 1326507024, %v42
    %v58 = vor.u32 %v56, %v57
    %vm59 = vcmp.lt.s32.totalorder %v40, 1
    %vm60 = vcmp.lt.s32.totalorder %v40, 2
    %vm61 = vcmp.lt.s32.totalorder %v40, 3
    %vm62 = vcmp.lt.s32.totalorder %v40, 4
    %v63 = vsel %vm59, %v43, %v46
    %v64 = vsel %vm62, %v52, 2102212464
    %v65 = vsel %vm61, %v49, %v64
    %v66 = vsel %vm60, %v63, %v65
    %v67 = vsel %vm59, %v46, %v49
    %v68 = vsel %vm62, %v55, 920167782
    %v69 = vsel %vm61, %v52, %v68
    %v70 = vsel %vm60, %v67, %v69
    %v71 = vsel %vm59, %v49, %v52
    %v72 = vsel %vm62, %v58, 1326507024
    %v73 = vsel %vm61, %v55, %v72
    %v74 = vsel %vm60, %v71, %v73
    %v75 = vshll.u32 %v35, 8
    %v76 = vand.u32 %v75, 65535
    %v77 = vshrl.u32 %v75, 16
    %v78 = vand.u32 %v74, 65535
    %v79 = vshrl.u32 %v74, 16
    %v80 = vmul.u32 %v76, %v78
    %v81 = vmul.u32 %v76, %v79
    %v82 = vmul.u32 %v77, %v78
    %v83 = vmul.u32 %v77, %v79
    %v84 = vshll.u32 %v81, 16
    %v85 = vshrl.u32 %v81, 16
    %v86 = vshll.u32 %v82, 16
    %v87 = vshrl.u32 %v82, 16
    %vm88 = vc.u32 %v80, %v84
    %v89 = vsel %vm88, 1, 0
    %v90 = vadd.s32 %v80, %v84
    %v91 = vadd.s32 %v83, %v89
    %vm92 = vc.u32 %v90, %v86
    %v93 = vsel %vm92, 1, 0
    %v94 = vadd.s32 %v90, %v86
    %v95 = vadd.s32 %v91, %v93
    %v96 = vadd.s32 %v95, %v85
    %v97 = vadd.s32 %v96, %v87
    %v98 = vand.u32 %v75, 65535
    %v99 = vshrl.u32 %v75, 16
    %v100 = vand.u32 %v70, 65535
    %v101 = vshrl.u32 %v70, 16
    %v102 = vmul.u32 %v98, %v100
    %v103 = vmul.u32 %v98, %v101
    %v104 = vmul.u32 %v99, %v100
    %v105 = vmul.u32 %v99, %v101
    %v106 = vshll.u32 %v103, 16
    %v107 = vshrl.u32 %v103, 16
    %v108 = vshll.u32 %v104, 16
    %v109 = vshrl.u32 %v104, 16
    %vm110 = vc.u32 %v102, %v106
    %v111 = vsel %vm110, 1, 0
    %v112 = vadd.s32 %v102, %v106
    %v113 = vadd.s32 %v105, %v111
    %vm114 = vc.u32 %v112, %v108
    %v115 = vsel %vm114, 1, 0
    %v116 = vadd.s32 %v112, %v108
    %v117 = vadd.s32 %v113, %v115
    %v118 = vadd.s32 %v117, %v107
    %v119 = vadd.s32 %v118, %v109
    %v120 = vmul.u32 %v75, %v66
    %v121 = vadd.s32 %v97, %v116
    %vm122 = vc.u32 %v97, %v116
    %v123 = vadd.s32 %v119, 1
    %v124 = vsel %vm122, %v123, %v119
    %v125 = vadd.s32 %v120, %v124
    %v126 = vadd.s32 %v125, 536870912
    %v127 = vshrl.u32 %v126, 30
    %v128 = vshll.u32 %v127, 30
    %v129 = vsub.s32 %v125, %v128
    %vm130 = vcmp.lt.s32.totalorder %v129, 0
    %v131 = vsub.s32 0, %v129
    %v132 = vsel %vm130, %v131, %v129
    %v133 = vclz %v132
    %v134 = vsub.s32 %v133, 2
    %vm135 = vcmp.gt.s32.totalorder 0, %v134
    %v136 = vsel %vm135, 0, %v134
    %v137 = vsub.s32 32, %v136
    %v138 = vshll.u32 %v129, %v136
    %v139 = vshrl.u32 %v121, %v137
    %v140 = vor.u32 %v138, %v139
    %v141 = vsub.s32 4294967266, %v136
    %v142 = vadd.s32 %v141, 127
    %v143 = vshll.u32 %v142, 23
    %v144 = vor.u32 4788187, %v143
    %v145 = vand.u32 2147483647, %v144
    %v147 = vcvt.s32.f32 %v140
    %v148 = vmul.f32 %v147, %v145
    %v149 = vxor.u32 %v148, 2147483648
    %v150 = vsel %vm29, %v149, %v148
    %v151 = vsub.s32 4, %v127
    %v152 = vsel %vm29, %v151, %v127
    %v153 = vsel %vm28, %v25, %v150
    %v154 = vsel %vm28, 0, %v152
    %v155 = vmul.f32 %v153, %v153
    %v156 = vmul.f32 %v155, -0.001358992
    %v157 = vadd.f32 %v156, 0.041655596
    %v158 = vmul.f32 %v155, %v157
    %v159 = vadd.f32 %v158, -0.4999988
    %v160 = vmul.f32 %v155, %v159
    %v161 = vadd.f32 1.0, %v160
    %v162 = vmul.f32 %v153, %v153
    %v163 = vmul.f32 %v162, -0.00019511016
    %v164 = vadd.f32 %v163, 0.008332121
    %v165 = vmul.f32 %v162, %v164
    %v166 = vadd.f32 %v165, -0.16666654
    %v167 = vmul.f32 %v162, %v166
    %v168 = vadd.f32 %v167, 1.0
    %v169 = vmul.f32 %v168, %v153
    %vm170 = vweird.f32 %v25
    %v171 = vadd.s32 %v154, 3
    %v172 = vand.u32 %v171, 3
    %vm173 = vcmp.lt.s32.totalorder %v172, 2
    %vm174 = vcmp.eq.s32.totalorder %v172, 0
    %v175 = vxor.u32 %v169, 2147483648
    %v176 = vsel %vm174, %v161, %v175
    %vm177 = vcmp.eq.s32.totalorder %v172, 2
    %v178 = vxor.u32 %v161, 2147483648
    %v179 = vsel %vm177, %v178, %v169
    %v180 = vsel %vm173, %v176, %v179
    %v181 = vsel %vm170, nan, %v180
    %v182 = vand.u32 2147483647, %v26
    %vm183 = vcmp.le.f32.partialorder %v182, 0.7853982
    %vm184 = vcmp.lt.s32.totalorder %v26, 0
    %v185 = vand.u32 %v26, 2139095040
    %v186 = vshrl.u32 %v185, 23
    %v187 = vsub.s32 %v186, 127
    %v188 = vand.u32 2147483647, %v26
    %v189 = vand.u32 %v188, 8388607
    %v190 = vor.u32 %v189, 8388608
    %v191 = vsub.s32 0, %v190
    %v192 = vadd.s32 %v187, 1
    %vm193 = vcmp.gt.s32.totalorder %v192, 0
    %v194 = vsel %vm193, %v192, 0
    %v195 = vshrl.u32 %v194, 5
    %v196 = vand.u32 %v194, 31
    %v197 = vsub.s32 32, %v196
    %v198 = vshrl.u32 683565275, %v197
    %v199 = vshll.u32 683565275, %v196
    %v200 = vshrl.u32 2475754826, %v197
    %v201 = vor.u32 %v199, %v200
    %v202 = vshll.u32 2475754826, %v196
    %v203 = vshrl.u32 2131351028, %v197
    %v204 = vor.u32 %v202, %v203
    %v205 = vshll.u32 2131351028, %v196
    %v206 = vshrl.u32 2102212464, %v197
    %v207 = vor.u32 %v205, %v206
    %v208 = vshll.u32 2102212464, %v196
    %v209 = vshrl.u32 920167782, %v197
    %v210 = vor.u32 %v208, %v209
    %v211 = vshll.u32 920167782, %v196
    %v212 = vshrl.u32 1326507024, %v197
    %v213 = vor.u32 %v211, %v212
    %vm214 = vcmp.lt.s32.totalorder %v195, 1
    %vm215 = vcmp.lt.s32.totalorder %v195, 2
    %vm216 = vcmp.lt.s32.totalorder %v195, 3
    %vm217 = vcmp.lt.s32.totalorder %v195, 4
    %v218 = vsel %vm214, %v198, %v201
    %v219 = vsel %vm217, %v207, 2102212464
    %v220 = vsel %vm216, %v204, %v219
    %v221 = vsel %vm215, %v218, %v220
    %v222 = vsel %vm214, %v201, %v204
    %v223 = vsel %vm217, %v210, 920167782
    %v224 = vsel %vm216, %v207, %v223
    %v225 = vsel %vm215, %v222, %v224
    %v226 = vsel %vm214, %v204, %v207
    %v227 = vsel %vm217, %v213, 1326507024
    %v228 = vsel %vm216, %v210, %v227
    %v229 = vsel %vm215, %v226, %v228
    %v230 = vshll.u32 %v190, 8
    %v231 = vand.u32 %v230, 65535
    %v232 = vshrl.u32 %v230, 16
    %v233 = vand.u32 %v229, 65535
    %v234 = vshrl.u32 %v229, 16
    %v235 = vmul.u32 %v231, %v233
    %v236 = vmul.u32 %v231, %v234
    %v237 = vmul.u32 %v232, %v233
    %v238 = vmul.u32 %v232, %v234
    %v239 = vshll.u32 %v236, 16
    %v240 = vshrl.u32 %v236, 16
    %v241 = vshll.u32 %v237, 16
    %v242 = vshrl.u32 %v237, 16
    %vm243 = vc.u32 %v235, %v239
    %v244 = vsel %vm243, 1, 0
    %v245 = vadd.s32 %v235, %v239
    %v246 = vadd.s32 %v238, %v244
    %vm247 = vc.u32 %v245, %v241
    %v248 = vsel %vm247, 1, 0
    %v249 = vadd.s32 %v245, %v241
    %v250 = vadd.s32 %v246, %v248
    %v251 = vadd.s32 %v250, %v240
    %v252 = vadd.s32 %v251, %v242
    %v253 = vand.u32 %v230, 65535
    %v254 = vshrl.u32 %v230, 16
    %v255 = vand.u32 %v225, 65535
    %v256 = vshrl.u32 %v225, 16
    %v257 = vmul.u32 %v253, %v255
    %v258 = vmul.u32 %v253, %v256
    %v259 = vmul.u32 %v254, %v255
    %v260 = vmul.u32 %v254, %v256
    %v261 = vshll.u32 %v258, 16
    %v262 = vshrl.u32 %v258, 16
    %v263 = vshll.u32 %v259, 16
    %v264 = vshrl.u32 %v259, 16
    %vm265 = vc.u32 %v257, %v261
    %v266 = vsel %vm265, 1, 0
    %v267 = vadd.s32 %v257, %v261
    %v268 = vadd.s32 %v260, %v266
    %vm269 = vc.u32 %v267, %v263
    %v270 = vsel %vm269, 1, 0
    %v271 = vadd.s32 %v267, %v263
    %v272 = vadd.s32 %v268, %v270
    %v273 = vadd.s32 %v272, %v262
    %v274 = vadd.s32 %v273, %v264
    %v275 = vmul.u32 %v230, %v221
    %v276 = vadd.s32 %v252, %v271
    %vm277 = vc.u32 %v252, %v271
    %v278 = vadd.s32 %v274, 1
    %v279 = vsel %vm277, %v278, %v274
    %v280 = vadd.s32 %v275, %v279
    %v281 = vadd.s32 %v280, 536870912
    %v282 = vshrl.u32 %v281, 30
    %v283 = vshll.u32 %v282, 30
    %v284 = vsub.s32 %v280, %v283
    %vm285 = vcmp.lt.s32.totalorder %v284, 0
    %v286 = vsub.s32 0, %v284
    %v287 = vsel %vm285, %v286, %v284
    %v288 = vclz %v287
    %v289 = vsub.s32 %v288, 2
    %vm290 = vcmp.gt.s32.totalorder 0, %v289
    %v291 = vsel %vm290, 0, %v289
    %v292 = vsub.s32 32, %v291
    %v293 = vshll.u32 %v284, %v291
    %v294 = vshrl.u32 %v276, %v292
    %v295 = vor.u32 %v293, %v294
    %v296 = vsub.s32 4294967266, %v291
    %v297 = vadd.s32 %v296, 127
    %v298 = vshll.u32 %v297, 23
    %v299 = vor.u32 4788187, %v298
    %v300 = vand.u32 2147483647, %v299
    %v302 = vcvt.s32.f32 %v295
    %v303 = vmul.f32 %v302, %v300
    %v304 = vxor.u32 %v303, 2147483648
    %v305 = vsel %vm184, %v304, %v303
    %v306 = vsub.s32 4, %v282
    %v307 = vsel %vm184, %v306, %v282
    %v308 = vsel %vm183, %v26, %v305
    %v309 = vsel %vm183, 0, %v307
    %v310 = vmul.f32 %v308, %v308
    %v311 = vmul.f32 %v310, -0.001358992
    %v312 = vadd.f32 %v311, 0.041655596
    %v313 = vmul.f32 %v310, %v312
    %v314 = vadd.f32 %v313, -0.4999988
    %v315 = vmul.f32 %v310, %v314
    %v316 = vadd.f32 1.0, %v315
    %v317 = vmul.f32 %v308, %v308
    %v318 = vmul.f32 %v317, -0.00019511016
    %v319 = vadd.f32 %v318, 0.008332121
    %v320 = vmul.f32 %v317, %v319
    %v321 = vadd.f32 %v320, -0.16666654
    %v322 = vmul.f32 %v317, %v321
    %v323 = vadd.f32 %v322, 1.0
    %v324 = vmul.f32 %v323, %v308
    %vm325 = vweird.f32 %v26
    %v326 = vadd.s32 %v309, 3
    %v327 = vand.u32 %v326, 3
    %vm328 = vcmp.lt.s32.totalorder %v327, 2
    %vm329 = vcmp.eq.s32.totalorder %v327, 0
    %v330 = vxor.u32 %v324, 2147483648
    %v331 = vsel %vm329, %v316, %v330
    %vm332 = vcmp.eq.s32.totalorder %v327, 2
    %v333 = vxor.u32 %v316, 2147483648
    %v334 = vsel %vm332, %v333, %v324
    %v335 = vsel %vm328, %v331, %v334
    %v336 = vsel %vm325, nan, %v335
    %337 = vst [vmem:[#allocation5] sm:$0xff] %v181
    %338 = vst [vmem:[#allocation5 + $0x8] sm:$0xff] %v336
    // Predicated region
    $region10: #{tpu_custom_call.1} parent=1 // pred_check
      _
    $region11: #{tpu_custom_call.1} parent=1 // pred_check_branch
      %340 = sbr.rel (0) target = $region13
    $region12: #{tpu_custom_call.1} parent=1 // pred_region
      %342 = vsyncadd [#allocation4], 0
      %s344 = sshll.u32 [#allocation5], 4
      %s345 = int_to_ptr.vmem [resolvable:$true] %s344
      %s346 = sshll.u32 %s1, 4
      %s347 = int_to_ptr.hbm [resolvable:$true] %s346
      %349 = dma.vmem_to_hbm [thread:$0]  %s345, 256, %s347, [#allocation4]
    $region13: #{tpu_custom_call.1} parent=1 // pred_fallthru
      _
    // Predicated region
    $region14: #{tpu_custom_call.1} parent=1 // pred_check
      _
    $region15: #{tpu_custom_call.1} parent=1 // pred_check_branch
      %351 = sbr.rel (0) target = $region17
    $region16: #{tpu_custom_call.1} parent=1 // pred_region
      %353 = dma.done [#allocation4], 256
    $region17: #{tpu_custom_call.1} parent=1 // pred_fallthru
      _
    %354 = vsyncpa [#allocation3], 1
    %355 = vsyncpa [#allocation4], 1

</llo_original>
